<compile_context>
chip_gen: v7x
topology: tpu7x:2x2x1
jax: 0.10.0
libtpu: 0.0.40
codegen_flags: <defaults>
</compile_context>

<pallas_src>
import functools

import jax
import jax.numpy as jnp
from jax.experimental import pallas as pl
from jax.experimental.pallas import tpu as pltpu

# ---------------------------------------------------------------------------
# Model hyper-parameters (small shapes consistent with the module's forward).
# ---------------------------------------------------------------------------
EMBEDDING_DIM = 32          # E
IN_CHANNELS   = 1           # forward unsqueezes dim 1 -> must be 1
OUT_CHANNELS  = 4           # final Linear out_features (O)
NUM_KERNEL    = 8           # K feature maps per conv branch
KERNEL_SIZES  = (3, 4, 5)   # window heights h
DROPOUT_P     = 0.5         # identity at inference
BATCH         = 2           # B
SEQ_LEN       = 16          # L

H_MAX   = max(KERNEL_SIZES)
N_CONV  = len(KERNEL_SIZES) * NUM_KERNEL   # 24 real pooled channels
LANE    = 128
N_PAD   = LANE                             # fused conv channels, lane-dense
O_PAD   = LANE                             # fused FC outputs, lane-dense
NEG_BIG = -1e30                            # additive mask (avoid -inf * 0)


def _textcnn_kernel(seq_len, emb, h_max,
                    x_ref, mask_ref, w_ref, b_ref, fcw_ref, fcb_ref, out_ref):
    """Fused TextCNN forward for one batch tile.

    x_ref   : (TB, L, E)          f32
    mask_ref: (L, N_PAD)          f32   0 where the time step is valid for the
                                        branch owning that column, -1e30 else
    w_ref   : (h_max*E, N_PAD)    f32   fused, zero-padded conv weights
    b_ref   : (1, N_PAD)          f32   fused conv biases (zeros in pad cols)
    fcw_ref : (N_PAD, O_PAD)      f32   fused, zero-padded FC weight
    fcb_ref : (1, O_PAD)          f32
    out_ref : (TB, 1, O_PAD)      f32   lane-dense output block
    """
    TB = x_ref.shape[0]
    L, E = seq_len, emb
    rows = TB * L

    x2d = x_ref[...].reshape(rows, E)                     # (TB*L, E)

    # Fused conv of all branches as a sum of shifted matmuls accumulating in
    # f32.  Row t of the rolled operand is x[t + dh]; rows that cross a batch
    # (or wrap) boundary are exactly the ones killed by the time mask below.
    acc = jnp.dot(x2d, w_ref[0:E, :], preferred_element_type=jnp.float32)
    for dh in range(1, h_max):
        shifted = pltpu.roll(x2d, shift=rows - dh, axis=0)   # row t <- x[t+dh]
        acc = acc + jnp.dot(shifted, w_ref[dh * E:(dh + 1) * E, :],
                            preferred_element_type=jnp.float32)

    # Mask invalid trailing time steps per branch, max-pool over time, then
    # add the per-channel bias (commutes with the max).
    conv = acc.reshape(TB, L, N_PAD) + mask_ref[...][None, :, :]
    pooled = jnp.max(conv, axis=1) + b_ref[...]           # (TB, N_PAD)

    # TODO(synk): training-mode dropout would draw a mask with
    # pltpu.prng_seed/prng_random_bits and fold the 1/(1-p) scale into fc_w
    # at pack time; eval-mode dropout is identity.
    out = jnp.dot(pooled, fcw_ref[...],
                  preferred_element_type=jnp.float32) + fcb_ref[...]
    out_ref[...] = out[:, None, :].astype(out_ref.dtype)


def pack_params(params, seq_len):
    """Pack torch-layout params into fused, lane-dense (128-wide) operands."""
    E, K, O = EMBEDDING_DIM, NUM_KERNEL, OUT_CHANNELS
    w_fused = jnp.zeros((H_MAX * E, N_PAD), jnp.float32)
    b_fused = jnp.zeros((1, N_PAD), jnp.float32)
    mask = jnp.zeros((seq_len, N_PAD), jnp.float32)   # pad cols stay valid (0)
    t = jnp.arange(seq_len)
    for j, h in enumerate(KERNEL_SIZES):
        # torch Conv2d weight (K, 1, h, E) -> im2col layout (h*E, K),
        # dh-major / e-minor, matching the row-major reshape.
        w = params[f"conv_w{h}"].reshape(K, h * E).T
        w_fused = w_fused.at[: h * E, j * K:(j + 1) * K].set(w)
        b_fused = b_fused.at[0, j * K:(j + 1) * K].set(params[f"conv_b{h}"])
        col_mask = jnp.where(t < seq_len - h + 1, 0.0, NEG_BIG)      # (L,)
        mask = mask.at[:, j * K:(j + 1) * K].set(
            jnp.broadcast_to(col_mask[:, None], (seq_len, K)))
    fcw_fused = jnp.zeros((N_PAD, O_PAD), jnp.float32)
    fcw_fused = fcw_fused.at[:N_CONV, :O].set(params["fc_w"].T)
    fcb_fused = jnp.zeros((1, O_PAD), jnp.float32)
    fcb_fused = fcb_fused.at[0, :O].set(params["fc_b"])
    return w_fused, b_fused, mask, fcw_fused, fcb_fused


def textcnn_forward(x, params, *, batch_block=1):
    """x: (B, L, E) float32.  params: torch-layout weights (see init_params)."""
    B, L, E = x.shape
    assert E == EMBEDDING_DIM
    assert B % batch_block == 0
    TB = batch_block
    w_fused, b_fused, mask, fcw_fused, fcb_fused = pack_params(params, L)

    kernel = functools.partial(_textcnn_kernel, L, E, H_MAX)
    out = pl.pallas_call(
        kernel,
        out_shape=jax.ShapeDtypeStruct((B, 1, O_PAD), jnp.float32),
        grid_spec=pltpu.PrefetchScalarGridSpec(
            num_scalar_prefetch=0,
            grid=(B // TB,),
            in_specs=[
                pl.BlockSpec((TB, L, E), lambda i: (i, 0, 0)),          # x
                pl.BlockSpec((L, N_PAD), lambda i: (0, 0)),             # mask
                pl.BlockSpec((H_MAX * E, N_PAD), lambda i: (0, 0)),     # w
                pl.BlockSpec((1, N_PAD), lambda i: (0, 0)),             # b
                pl.BlockSpec((N_PAD, O_PAD), lambda i: (0, 0)),         # fc_w
                pl.BlockSpec((1, O_PAD), lambda i: (0, 0)),             # fc_b
            ],
            out_specs=pl.BlockSpec((TB, 1, O_PAD), lambda i: (i, 0, 0)),
        ),
        compiler_params=pltpu.CompilerParams(
            dimension_semantics=("parallel",)),
    )(x, mask, w_fused, b_fused, fcw_fused, fcb_fused)
    return out[:, 0, :OUT_CHANNELS]


def init_params(key):
    """Deterministic synthetic parameters in the PyTorch module's layouts."""
    keys = jax.random.split(key, 2 * len(KERNEL_SIZES) + 2)
    params = {}
    for i, h in enumerate(KERNEL_SIZES):
        params[f"conv_w{h}"] = 0.1 * jax.random.normal(
            keys[2 * i], (NUM_KERNEL, IN_CHANNELS, h, EMBEDDING_DIM),
            dtype=jnp.float32)
        params[f"conv_b{h}"] = 0.1 * jax.random.normal(
            keys[2 * i + 1], (NUM_KERNEL,), dtype=jnp.float32)
    params["fc_w"] = 0.1 * jax.random.normal(
        keys[-2], (OUT_CHANNELS, N_CONV), dtype=jnp.float32)
    params["fc_b"] = 0.1 * jax.random.normal(
        keys[-1], (OUT_CHANNELS,), dtype=jnp.float32)
    return params


def reference_forward(x, params):
    """Pure-JAX reference replicating the PyTorch forward (eval mode)."""
    B, L, E = x.shape
    pooled = []
    for h in KERNEL_SIZES:
        w = params[f"conv_w{h}"][:, 0]                       # (K, h, E)
        b = params[f"conv_b{h}"]                             # (K,)
        T = L - h + 1
        win = jnp.stack([x[:, t:t + h, :] for t in range(T)], axis=1)  # (B,T,h,E)
        conv = jnp.einsum("bthe,khe->btk", win, w,
                          precision=jax.lax.Precision.HIGHEST) + b
        pooled.append(jnp.max(conv, axis=1))                 # (B, K)
    feat = jnp.concatenate(pooled, axis=-1)                  # (B, 3K)
    return jnp.dot(feat, params["fc_w"].T,
                   precision=jax.lax.Precision.HIGHEST) + params["fc_b"]


if __name__ == "__main__":
    key = jax.random.PRNGKey(0)
    k_x, k_p = jax.random.split(key)
    x = jax.random.normal(k_x, (BATCH, SEQ_LEN, EMBEDDING_DIM),
                          dtype=jnp.float32)
    params = init_params(k_p)

    out = jax.block_until_ready(textcnn_forward(x, params, batch_block=1))
    ref = reference_forward(x, params)

    assert out.shape == (BATCH, OUT_CHANNELS)
    assert jnp.allclose(out, ref, atol=1e-3, rtol=1e-3), (
        float(jnp.max(jnp.abs(out - ref))))
    print("KERNEL_OK")
</pallas_src>

<mosaic_0001>
module attributes {stable_mosaic.version = 11 : i64} {
  func.func @_textcnn_kernel(%arg0: i32, %arg1: memref<1x16x32xf32, #tpu.memory_space<vmem>>, %arg2: memref<16x128xf32, #tpu.memory_space<vmem>>, %arg3: memref<160x128xf32, #tpu.memory_space<vmem>>, %arg4: memref<1x128xf32, #tpu.memory_space<vmem>>, %arg5: memref<128x128xf32, #tpu.memory_space<vmem>>, %arg6: memref<1x128xf32, #tpu.memory_space<vmem>>, %arg7: memref<1x1x128xf32, #tpu.memory_space<vmem>>) attributes {dimension_semantics = [#tpu.dimension_semantics<parallel>], iteration_bounds = array<i64: 2>, scalar_prefetch = 0 : i64, scratch_operands = 0 : i64, tpu.core_type = #tpu.core_type<tc>, window_params = [{transform_indices = @transform_0, window_bounds = array<i64: 1, 16, 32>}, {pipeline_mode = #tpu.pipeline_mode<synchronous>, transform_indices = @transform_1, window_bounds = array<i64: 16, 128>}, {pipeline_mode = #tpu.pipeline_mode<synchronous>, transform_indices = @transform_2, window_bounds = array<i64: 160, 128>}, {pipeline_mode = #tpu.pipeline_mode<synchronous>, transform_indices = @transform_3, window_bounds = array<i64: 1, 128>}, {pipeline_mode = #tpu.pipeline_mode<synchronous>, transform_indices = @transform_4, window_bounds = array<i64: 128, 128>}, {pipeline_mode = #tpu.pipeline_mode<synchronous>, transform_indices = @transform_5, window_bounds = array<i64: 1, 128>}, {transform_indices = @transform_6, window_bounds = array<i64: 1, 1, 128>}]} {
    %c0 = arith.constant 0 : index
    %c0_0 = arith.constant 0 : index
    %c0_1 = arith.constant 0 : index
    %0 = vector.load %arg1[%c0, %c0_0, %c0_1] : memref<1x16x32xf32, #tpu.memory_space<vmem>>, vector<1x16x32xf32>
    %1 = vector.shape_cast %0 : vector<1x16x32xf32> to vector<16x32xf32>
    %c0_2 = arith.constant 0 : index
    %c0_3 = arith.constant 0 : index
    %2 = vector.load %arg3[%c0_2, %c0_3] : memref<160x128xf32, #tpu.memory_space<vmem>>, vector<32x128xf32>
    %cst = arith.constant dense<0.000000e+00> : vector<16x128xf32>
    %3 = tpu.matmul %1, %2, %cst {dimension_numbers = #tpu.dot_dimension_numbers<[1], [0], [0], [1], [0, 0, 1, 1], [], []>} : vector<16x32xf32>, vector<32x128xf32>, vector<16x128xf32> -> vector<16x128xf32>
    %c15_i32 = arith.constant 15 : i32
    %4 = tpu.dynamic_rotate %1 by %c15_i32 dim 0 : vector<16x32xf32>, i32 -> vector<16x32xf32>
    %c32 = arith.constant 32 : index
    %c0_4 = arith.constant 0 : index
    %5 = vector.load %arg3[%c32, %c0_4] : memref<160x128xf32, #tpu.memory_space<vmem>>, vector<32x128xf32>
    %cst_5 = arith.constant dense<0.000000e+00> : vector<16x128xf32>
    %6 = tpu.matmul %4, %5, %cst_5 {dimension_numbers = #tpu.dot_dimension_numbers<[1], [0], [0], [1], [0, 0, 1, 1], [], []>} : vector<16x32xf32>, vector<32x128xf32>, vector<16x128xf32> -> vector<16x128xf32>
    %7 = arith.addf %3, %6 : vector<16x128xf32>
    %c14_i32 = arith.constant 14 : i32
    %8 = tpu.dynamic_rotate %1 by %c14_i32 dim 0 : vector<16x32xf32>, i32 -> vector<16x32xf32>
    %c64 = arith.constant 64 : index
    %c0_6 = arith.constant 0 : index
    %9 = vector.load %arg3[%c64, %c0_6] : memref<160x128xf32, #tpu.memory_space<vmem>>, vector<32x128xf32>
    %cst_7 = arith.constant dense<0.000000e+00> : vector<16x128xf32>
    %10 = tpu.matmul %8, %9, %cst_7 {dimension_numbers = #tpu.dot_dimension_numbers<[1], [0], [0], [1], [0, 0, 1, 1], [], []>} : vector<16x32xf32>, vector<32x128xf32>, vector<16x128xf32> -> vector<16x128xf32>
    %11 = arith.addf %7, %10 : vector<16x128xf32>
    %c13_i32 = arith.constant 13 : i32
    %12 = tpu.dynamic_rotate %1 by %c13_i32 dim 0 : vector<16x32xf32>, i32 -> vector<16x32xf32>
    %c96 = arith.constant 96 : index
    %c0_8 = arith.constant 0 : index
    %13 = vector.load %arg3[%c96, %c0_8] : memref<160x128xf32, #tpu.memory_space<vmem>>, vector<32x128xf32>
    %cst_9 = arith.constant dense<0.000000e+00> : vector<16x128xf32>
    %14 = tpu.matmul %12, %13, %cst_9 {dimension_numbers = #tpu.dot_dimension_numbers<[1], [0], [0], [1], [0, 0, 1, 1], [], []>} : vector<16x32xf32>, vector<32x128xf32>, vector<16x128xf32> -> vector<16x128xf32>
    %15 = arith.addf %11, %14 : vector<16x128xf32>
    %c12_i32 = arith.constant 12 : i32
    %16 = tpu.dynamic_rotate %1 by %c12_i32 dim 0 : vector<16x32xf32>, i32 -> vector<16x32xf32>
    %c128 = arith.constant 128 : index
    %c0_10 = arith.constant 0 : index
    %17 = vector.load %arg3[%c128, %c0_10] : memref<160x128xf32, #tpu.memory_space<vmem>>, vector<32x128xf32>
    %cst_11 = arith.constant dense<0.000000e+00> : vector<16x128xf32>
    %18 = tpu.matmul %16, %17, %cst_11 {dimension_numbers = #tpu.dot_dimension_numbers<[1], [0], [0], [1], [0, 0, 1, 1], [], []>} : vector<16x32xf32>, vector<32x128xf32>, vector<16x128xf32> -> vector<16x128xf32>
    %19 = arith.addf %15, %18 : vector<16x128xf32>
    %20 = vector.shape_cast %19 : vector<16x128xf32> to vector<1x16x128xf32>
    %c0_12 = arith.constant 0 : index
    %c0_13 = arith.constant 0 : index
    %21 = vector.load %arg2[%c0_12, %c0_13] : memref<16x128xf32, #tpu.memory_space<vmem>>, vector<16x128xf32>
    %22 = vector.shape_cast %21 : vector<16x128xf32> to vector<1x16x128xf32>
    %23 = arith.addf %20, %22 : vector<1x16x128xf32>
    %cst_14 = arith.constant dense<0xFF800000> : vector<1x128xf32>
    %24 = vector.multi_reduction <maximumf>, %23, %cst_14 [1] : vector<1x16x128xf32> to vector<1x128xf32>
    %c0_15 = arith.constant 0 : index
    %c0_16 = arith.constant 0 : index
    %25 = vector.load %arg4[%c0_15, %c0_16] : memref<1x128xf32, #tpu.memory_space<vmem>>, vector<1x128xf32>
    %26 = arith.addf %24, %25 : vector<1x128xf32>
    %c0_17 = arith.constant 0 : index
    %c0_18 = arith.constant 0 : index
    %27 = vector.load %arg5[%c0_17, %c0_18] : memref<128x128xf32, #tpu.memory_space<vmem>>, vector<128x128xf32>
    %cst_19 = arith.constant dense<0.000000e+00> : vector<1x128xf32>
    %28 = tpu.matmul %26, %27, %cst_19 {dimension_numbers = #tpu.dot_dimension_numbers<[1], [0], [0], [1], [0, 0, 1, 1], [], []>} : vector<1x128xf32>, vector<128x128xf32>, vector<1x128xf32> -> vector<1x128xf32>
    %c0_20 = arith.constant 0 : index
    %c0_21 = arith.constant 0 : index
    %29 = vector.load %arg6[%c0_20, %c0_21] : memref<1x128xf32, #tpu.memory_space<vmem>>, vector<1x128xf32>
    %30 = arith.addf %28, %29 : vector<1x128xf32>
    %31 = vector.shape_cast %30 : vector<1x128xf32> to vector<1x1x128xf32>
    %c0_22 = arith.constant 0 : index
    %c0_23 = arith.constant 0 : index
    %c0_24 = arith.constant 0 : index
    %32 = vector.load %arg7[%c0_22, %c0_23, %c0_24] : memref<1x1x128xf32, #tpu.memory_space<vmem>>, vector<1x1x128xf32>
    tpu.vector_store %arg7[%c0_22, %c0_23, %c0_24], %31 {strides = array<i32>} : memref<1x1x128xf32, #tpu.memory_space<vmem>>, vector<1x1x128xf32>,
    return
  }
  func.func @transform_0(%arg0: i32) -> (i32, i32, i32) {
    %c0_i32 = arith.constant 0 : i32
    %c0_i32_0 = arith.constant 0 : i32
    %c0_i32_1 = arith.constant 0 : i32
    return %arg0, %c0_i32, %c0_i32_0 : i32, i32, i32
  }
  func.func @transform_1(%arg0: i32) -> (i32, i32) {
    %c0_i32 = arith.constant 0 : i32
    %c0_i32_0 = arith.constant 0 : i32
    %c0_i32_1 = arith.constant 0 : i32
    return %c0_i32, %c0_i32_0 : i32, i32
  }
  func.func @transform_2(%arg0: i32) -> (i32, i32) {
    %c0_i32 = arith.constant 0 : i32
    %c0_i32_0 = arith.constant 0 : i32
    %c0_i32_1 = arith.constant 0 : i32
    return %c0_i32, %c0_i32_0 : i32, i32
  }
  func.func @transform_3(%arg0: i32) -> (i32, i32) {
    %c0_i32 = arith.constant 0 : i32
    %c0_i32_0 = arith.constant 0 : i32
    %c0_i32_1 = arith.constant 0 : i32
    return %c0_i32, %c0_i32_0 : i32, i32
  }
  func.func @transform_4(%arg0: i32) -> (i32, i32) {
    %c0_i32 = arith.constant 0 : i32
    %c0_i32_0 = arith.constant 0 : i32
    %c0_i32_1 = arith.constant 0 : i32
    return %c0_i32, %c0_i32_0 : i32, i32
  }
  func.func @transform_5(%arg0: i32) -> (i32, i32) {
    %c0_i32 = arith.constant 0 : i32
    %c0_i32_0 = arith.constant 0 : i32
    %c0_i32_1 = arith.constant 0 : i32
    return %c0_i32, %c0_i32_0 : i32, i32
  }
  func.func @transform_6(%arg0: i32) -> (i32, i32, i32) {
    %c0_i32 = arith.constant 0 : i32
    %c0_i32_0 = arith.constant 0 : i32
    %c0_i32_1 = arith.constant 0 : i32
    return %arg0, %c0_i32, %c0_i32_0 : i32, i32, i32
  }
}

</mosaic_0001>

<llo_original>
// kernel: tpu_custom_call.1
$region0: #{tpu_custom_call.1}
  #allocation0 [shape = 'u32[]', space=smem, size = 0x4, offset = 0x4, fixed_abs, tag = 'smem constant byte address 0x4 - core index']
  #allocation1 [shape = 'u32[144,128]{1,0:T(1,128)}', space=vmem, size = 0x12000, scoped, tag = 'internal scratch']
  %s0 = inlined_call_operand.hbm [shape: f32[2,16,32], index: 0, kind: input, shape index: {}]
  %s1 = inlined_call_operand.hbm [shape: f32[16,128], index: 1, kind: input, shape index: {}]
  %s2 = inlined_call_operand.hbm [shape: f32[160,128], index: 2, kind: input, shape index: {}]
  %s3 = inlined_call_operand.vmem [shape: f32[1,128], index: 3, kind: input, shape index: {}]
  %s4 = inlined_call_operand.hbm [shape: f32[128,128], index: 4, kind: input, shape index: {}]
  %s5 = inlined_call_operand.vmem [shape: f32[1,128], index: 5, kind: input, shape index: {}]
  %s6 = inlined_call_operand.hbm [shape: f32[2,1,128], index: 6, kind: output, shape index: {}]
  %s7 = sld [smem:[#allocation0]]
  $region73: #{tpu_custom_call.1} parent=0
    _
  %s9 = ssub.s32 1, %s7
  %s10 = scalar_select 0, %s9, %s7
  $region1: #{tpu_custom_call.1} parent=0
    #allocation2 [shape = 'u8[16384]{0}', space=vmem, size = 0x4000, scoped, tag = 'input window, operand 0']
    #allocation3 [shape = 's32[2]{0}', space=sflag, size = 0x8, scoped, tag = 'scoped memory for tpu_custom_call.1']
    #allocation4 [shape = 's32[2]{0}', space=sflag, size = 0x8, scoped, tag = 'scoped memory for tpu_custom_call.1']
    #allocation5 [shape = 'u8[8192]{0}', space=vmem, size = 0x2000, scoped, tag = 'input window, operand 1, single buffered']
    #allocation6 [shape = 's32[1]{0}', space=sflag, size = 0x4, scoped, tag = 'scoped memory for tpu_custom_call.1']
    #allocation7 [shape = 'u8[81920]{0}', space=vmem, size = 0x14000, scoped, tag = 'input window, operand 2, single buffered']
    #allocation8 [shape = 'u8[65536]{0}', space=vmem, size = 0x10000, scoped, tag = 'input window, operand 4, single buffered']
    #allocation9 [shape = 's32[1]{0}', space=sflag, size = 0x4, scoped, tag = 'scoped memory for tpu_custom_call.1']
    #allocation10 [shape = 'u8[1024]{0}', space=vmem, size = 0x400, scoped, tag = 'output window, operand 0']
    %11 = vsyncpa [#allocation3], 0
    %s12 = scalar_lea.sflag [#allocation3], 1
    %13 = vsyncpa %s12, 0
    %14 = vsyncpa [#allocation6], 0
    %15 = vsyncpa [#allocation9], 0
    %16 = vsyncpa [#allocation4], 0
    %s17 = scalar_lea.sflag [#allocation4], 1
    %18 = vsyncpa %s17, 0
    loop: start=0, step=1, limit=4
    $region2: #{tpu_custom_call.1} parent=1 // loop_pre_header
      _
    $region3: #{tpu_custom_call.1} parent=1 // loop_header
      %s20 = sphi 0, %s24
      %p21 = scmp.ge.s32.totalorder %s20, 4
      %s30 = sphi 0, %s32
      %s33 = sphi 0, %s30
      %s34 = sphi 0, %s33
      %s50 = sphi 0, %s34
      %s54 = sphi 0, %s54
      %s56 = sphi 0, %s54
      %s57 = sphi 0, %s56
      %s71 = sphi 0, %s57
      %s75 = sphi 0, %s75
      %s77 = sphi 0, %s75
      %s78 = sphi 0, %s77
      %s92 = sphi 0, %s78
      %s96 = sphi 0, %s96
      %s98 = sphi 0, %s96
      %s99 = sphi 0, %s98
      %s113 = sphi 0, %s99
      %s117 = sphi 0, %s117
      %s119 = sphi 0, %s117
      %s120 = sphi 0, %s119
      %s134 = sphi 0, %s120
      %s138 = sphi 0, %s138
      %s140 = sphi 0, %s138
      %s141 = sphi 0, %s140
      %s155 = sphi 0, %s141
      %s161 = sphi 0, %s163
      %s164 = sphi 0, %s161
      %s165 = sphi 0, %s164
      %s181 = sphi 0, %s165
    $region4: #{tpu_custom_call.1} parent=1 // loop_header_branch
      %23 = sbr.rel (%p21) target = $region8
    $region5: #{tpu_custom_call.1} parent=1 // loop_body
      %s25 = ssub.s32 %s20, 1
      %s26 = ssub.s32 %s20, 2
      %s27 = sadd.s32 %s20, 1
      %s28 = ssub.s32 %s20, %s27
      %p29 = scmp.eq.s32.totalorder %s28, 0
      %s31 = sadd.s32 %s30, 1
      %s32 = scalar_select %p29, %s30, %s31
      %p35 = pneg %p29
      %p36 = scmp.eq.s32.totalorder %s20, 1
      %p37 = por %p35, %p36
      %p38 = scmp.ne.s32.totalorder %s30, %s33
      %p39 = scmp.eq.s32.totalorder %s20, 0
      %p40 = por %p38, %p39
      %p41 = scmp.ne.s32.totalorder %s30, %s33
      %p42 = scmp.eq.s32.totalorder %s25, 1
      %p43 = por %p41, %p42
      %p44 = scmp.ne.s32.totalorder %s33, %s34
      %p45 = scmp.eq.s32.totalorder %s25, 0
      %p46 = por %p44, %p45
      %p47 = scmp.ne.s32.totalorder %s33, %s34
      %p48 = scmp.eq.s32.totalorder %s26, 1
      %p49 = por %p47, %p48
      %p51 = scmp.ne.s32.totalorder %s34, %s50
      %p52 = scmp.eq.s32.totalorder %s26, 0
      %p53 = por %p51, %p52
      %s55 = sadd.s32 %s54, 1
      %p58 = scmp.eq.s32.totalorder %s20, 1
      %p59 = scmp.ne.s32.totalorder %s54, %s56
      %p60 = scmp.eq.s32.totalorder %s20, 0
      %p61 = por %p59, %p60
      %p62 = scmp.ne.s32.totalorder %s54, %s56
      %p63 = scmp.eq.s32.totalorder %s25, 1
      %p64 = por %p62, %p63
      %p65 = scmp.ne.s32.totalorder %s56, %s57
      %p66 = scmp.eq.s32.totalorder %s25, 0
      %p67 = por %p65, %p66
      %p68 = scmp.ne.s32.totalorder %s56, %s57
      %p69 = scmp.eq.s32.totalorder %s26, 1
      %p70 = por %p68, %p69
      %p72 = scmp.ne.s32.totalorder %s57, %s71
      %p73 = scmp.eq.s32.totalorder %s26, 0
      %p74 = por %p72, %p73
      %s76 = sadd.s32 %s75, 1
      %p79 = scmp.eq.s32.totalorder %s20, 1
      %p80 = scmp.ne.s32.totalorder %s75, %s77
      %p81 = scmp.eq.s32.totalorder %s20, 0
      %p82 = por %p80, %p81
      %p83 = scmp.ne.s32.totalorder %s75, %s77
      %p84 = scmp.eq.s32.totalorder %s25, 1
      %p85 = por %p83, %p84
      %p86 = scmp.ne.s32.totalorder %s77, %s78
      %p87 = scmp.eq.s32.totalorder %s25, 0
      %p88 = por %p86, %p87
      %p89 = scmp.ne.s32.totalorder %s77, %s78
      %p90 = scmp.eq.s32.totalorder %s26, 1
      %p91 = por %p89, %p90
      %p93 = scmp.ne.s32.totalorder %s78, %s92
      %p94 = scmp.eq.s32.totalorder %s26, 0
      %p95 = por %p93, %p94
      %s97 = sadd.s32 %s96, 1
      %p100 = scmp.eq.s32.totalorder %s20, 1
      %p101 = scmp.ne.s32.totalorder %s96, %s98
      %p102 = scmp.eq.s32.totalorder %s20, 0
      %p103 = por %p101, %p102
      %p104 = scmp.ne.s32.totalorder %s96, %s98
      %p105 = scmp.eq.s32.totalorder %s25, 1
      %p106 = por %p104, %p105
      %p107 = scmp.ne.s32.totalorder %s98, %s99
      %p108 = scmp.eq.s32.totalorder %s25, 0
      %p109 = por %p107, %p108
      %p110 = scmp.ne.s32.totalorder %s98, %s99
      %p111 = scmp.eq.s32.totalorder %s26, 1
      %p112 = por %p110, %p111
      %p114 = scmp.ne.s32.totalorder %s99, %s113
      %p115 = scmp.eq.s32.totalorder %s26, 0
      %p116 = por %p114, %p115
      %s118 = sadd.s32 %s117, 1
      %p121 = scmp.eq.s32.totalorder %s20, 1
      %p122 = scmp.ne.s32.totalorder %s117, %s119
      %p123 = scmp.eq.s32.totalorder %s20, 0
      %p124 = por %p122, %p123
      %p125 = scmp.ne.s32.totalorder %s117, %s119
      %p126 = scmp.eq.s32.totalorder %s25, 1
      %p127 = por %p125, %p126
      %p128 = scmp.ne.s32.totalorder %s119, %s120
      %p129 = scmp.eq.s32.totalorder %s25, 0
      %p130 = por %p128, %p129
      %p131 = scmp.ne.s32.totalorder %s119, %s120
      %p132 = scmp.eq.s32.totalorder %s26, 1
      %p133 = por %p131, %p132
      %p135 = scmp.ne.s32.totalorder %s120, %s134
      %p136 = scmp.eq.s32.totalorder %s26, 0
      %p137 = por %p135, %p136
      %s139 = sadd.s32 %s138, 1
      %p142 = scmp.eq.s32.totalorder %s20, 1
      %p143 = scmp.ne.s32.totalorder %s138, %s140
      %p144 = scmp.eq.s32.totalorder %s20, 0
      %p145 = por %p143, %p144
      %p146 = scmp.ne.s32.totalorder %s138, %s140
      %p147 = scmp.eq.s32.totalorder %s25, 1
      %p148 = por %p146, %p147
      %p149 = scmp.ne.s32.totalorder %s140, %s141
      %p150 = scmp.eq.s32.totalorder %s25, 0
      %p151 = por %p149, %p150
      %p152 = scmp.ne.s32.totalorder %s140, %s141
      %p153 = scmp.eq.s32.totalorder %s26, 1
      %p154 = por %p152, %p153
      %p156 = scmp.ne.s32.totalorder %s141, %s155
      %p157 = scmp.eq.s32.totalorder %s26, 0
      %p158 = por %p156, %p157
      %s159 = ssub.s32 %s20, %s27
      %p160 = scmp.eq.s32.totalorder %s159, 0
      %s162 = sadd.s32 %s161, 1
      %s163 = scalar_select %p160, %s161, %s162
      %p166 = pneg %p160
      %p167 = scmp.eq.s32.totalorder %s20, 1
      %p168 = por %p166, %p167
      %p169 = scmp.ne.s32.totalorder %s161, %s164
      %p170 = scmp.eq.s32.totalorder %s20, 0
      %p171 = por %p169, %p170
      %p172 = scmp.ne.s32.totalorder %s161, %s164
      %p173 = scmp.eq.s32.totalorder %s25, 1
      %p174 = por %p172, %p173
      %p175 = scmp.ne.s32.totalorder %s164, %s165
      %p176 = scmp.eq.s32.totalorder %s25, 0
      %p177 = por %p175, %p176
      %p178 = scmp.ne.s32.totalorder %s164, %s165
      %p179 = scmp.eq.s32.totalorder %s26, 1
      %p180 = por %p178, %p179
      %p182 = scmp.ne.s32.totalorder %s165, %s181
      %p183 = scmp.eq.s32.totalorder %s26, 0
      %p184 = por %p182, %p183
      %p185 = scmp.le.s32.totalorder 1, %s20
      %p186 = scmp.lt.s32.totalorder %s20, 3
      %p187 = pnand %p185, %p186
      %p188 = pneg %p187
      // Predicated region
      $region9: #{tpu_custom_call.1} parent=5 // pred_check
        _
      $region10: #{tpu_custom_call.1} parent=5 // pred_check_branch
        %190 = sbr.rel (%p187) target = $region12
      $region11: #{tpu_custom_call.1} parent=5 // pred_region
        %s191 = ssub.s32 %s20, 1
        // Predicated region
        $region13: #{tpu_custom_call.1} parent=11 // pred_check
          %p192 = pneg %p67
        $region14: #{tpu_custom_call.1} parent=11 // pred_check_branch
          %194 = sbr.rel (%p192) target = $region16
        $region15: #{tpu_custom_call.1} parent=11 // pred_region
          %s196 = ssub.s32 256, 256
          %197 = vsyncadd [#allocation6], %s196
          %s198 = sshll.u32 [#allocation5], 4
          %s199 = int_to_ptr.vmem [resolvable:$true] %s198
          %204 = dma.hbm_to_vmem [thread:$0]  %s1, 256, %s199, [#allocation6], 128, 128, 8
        $region16: #{tpu_custom_call.1} parent=11 // pred_fallthru
          _
        // Predicated region
        $region17: #{tpu_custom_call.1} parent=11 // pred_check
          %p205 = pneg %p88
        $region18: #{tpu_custom_call.1} parent=11 // pred_check_branch
          %207 = sbr.rel (%p205) target = $region20
        $region19: #{tpu_custom_call.1} parent=11 // pred_region
          %s209 = ssub.s32 2560, 2560
          %210 = vsyncadd [#allocation6], %s209
          %s211 = sshll.u32 [#allocation7], 4
          %s212 = int_to_ptr.vmem [resolvable:$true] %s211
          %217 = dma.hbm_to_vmem [thread:$0]  %s2, 2560, %s212, [#allocation6], 128, 128, 8
        $region20: #{tpu_custom_call.1} parent=11 // pred_fallthru
          _
        // Predicated region
        $region21: #{tpu_custom_call.1} parent=11 // pred_check
          %p218 = pneg %p109
        $region22: #{tpu_custom_call.1} parent=11 // pred_check_branch
          %220 = sbr.rel (%p218) target = $region24
        $region23: #{tpu_custom_call.1} parent=11 // pred_region
          _
        $region24: #{tpu_custom_call.1} parent=11 // pred_fallthru
          _
        // Predicated region
        $region25: #{tpu_custom_call.1} parent=11 // pred_check
          %p221 = pneg %p130
        $region26: #{tpu_custom_call.1} parent=11 // pred_check_branch
          %223 = sbr.rel (%p221) target = $region28
        $region27: #{tpu_custom_call.1} parent=11 // pred_region
          %s225 = ssub.s32 2048, 2048
          %226 = vsyncadd [#allocation9], %s225
          %s227 = sshll.u32 [#allocation8], 4
          %s228 = int_to_ptr.vmem [resolvable:$true] %s227
          %233 = dma.hbm_to_vmem [thread:$0]  %s4, 2048, %s228, [#allocation9], 128, 128, 8
        $region28: #{tpu_custom_call.1} parent=11 // pred_fallthru
          _
        // Predicated region
        $region29: #{tpu_custom_call.1} parent=11 // pred_check
          %p234 = pneg %p151
        $region30: #{tpu_custom_call.1} parent=11 // pred_check_branch
          %236 = sbr.rel (%p234) target = $region32
        $region31: #{tpu_custom_call.1} parent=11 // pred_region
          _
        $region32: #{tpu_custom_call.1} parent=11 // pred_fallthru
          _
      $region12: #{tpu_custom_call.1} parent=5 // pred_fallthru
        _
      %p237 = scmp.lt.s32.totalorder %s20, 2
      // Predicated region
      $region33: #{tpu_custom_call.1} parent=5 // pred_check
        %p238 = pneg %p237
      $region34: #{tpu_custom_call.1} parent=5 // pred_check_branch
        %240 = sbr.rel (%p238) target = $region36
      $region35: #{tpu_custom_call.1} parent=5 // pred_region
        // Predicated region
        $region37: #{tpu_custom_call.1} parent=35 // pred_check
          %p241 = pneg %p40
        $region38: #{tpu_custom_call.1} parent=35 // pred_check_branch
          %243 = sbr.rel (%p241) target = $region40
        $region39: #{tpu_custom_call.1} parent=35 // pred_region
          %s244 = sand.u32 %s30, 1
          %s245 = scalar_lea.sflag [#allocation3], %s244
          %s246 = sand.u32 %s30, 1
          %s247 = smul.addr %s246, 16
          %s248 = scalar_lea.vmem [#allocation2], %s247
          %s250 = ssub.s32 256, 256
          %251 = vsyncadd %s245, %s250
          %s252 = smul.addr %s20, 2
          %s253 = smul.addr %s252, 128
          %s254 = scalar_lea.hbm %s0, %s253
          %s255 = sshll.u32 %s248, 4
          %s256 = int_to_ptr.vmem [resolvable:$true] %s255
          %261 = dma.hbm_to_vmem [thread:$0]  %s254, 256, %s256, %s245, 128, 128, 8
        $region40: #{tpu_custom_call.1} parent=35 // pred_fallthru
          _
      $region36: #{tpu_custom_call.1} parent=5 // pred_fallthru
        _
      %p262 = scmp.le.s32.totalorder 1, %s20
      %p263 = scmp.lt.s32.totalorder %s20, 3
      %p264 = pnand %p262, %p263
      %p265 = pneg %p264
      // Predicated region
      $region41: #{tpu_custom_call.1} parent=5 // pred_check
        _
      $region42: #{tpu_custom_call.1} parent=5 // pred_check_branch
        %267 = sbr.rel (%p264) target = $region44
      $region43: #{tpu_custom_call.1} parent=5 // pred_region
        %s268 = ssub.s32 %s20, 1
        %s269 = sand.u32 %s33, 1
        %s270 = scalar_lea.sflag [#allocation3], %s269
        %s271 = sand.u32 %s33, 1
        %s272 = smul.addr %s271, 16
        %s273 = scalar_lea.vmem [#allocation2], %s272
        // Predicated region
        $region45: #{tpu_custom_call.1} parent=43 // pred_check
          %p274 = pneg %p46
        $region46: #{tpu_custom_call.1} parent=43 // pred_check_branch
          %276 = sbr.rel (%p274) target = $region48
        $region47: #{tpu_custom_call.1} parent=43 // pred_region
          %277 = dma.done %s270, 256
        $region48: #{tpu_custom_call.1} parent=43 // pred_fallthru
          _
        // Predicated region
        $region49: #{tpu_custom_call.1} parent=43 // pred_check
          %p278 = pneg %p67
        $region50: #{tpu_custom_call.1} parent=43 // pred_check_branch
          %280 = sbr.rel (%p278) target = $region52
        $region51: #{tpu_custom_call.1} parent=43 // pred_region
          %281 = dma.done [#allocation6], 256
        $region52: #{tpu_custom_call.1} parent=43 // pred_fallthru
          _
        // Predicated region
        $region53: #{tpu_custom_call.1} parent=43 // pred_check
          %p282 = pneg %p88
        $region54: #{tpu_custom_call.1} parent=43 // pred_check_branch
          %284 = sbr.rel (%p282) target = $region56
        $region55: #{tpu_custom_call.1} parent=43 // pred_region
          %285 = dma.done [#allocation6], 2560
        $region56: #{tpu_custom_call.1} parent=43 // pred_fallthru
          _
        // Predicated region
        $region57: #{tpu_custom_call.1} parent=43 // pred_check
          %p286 = pneg %p130
        $region58: #{tpu_custom_call.1} parent=43 // pred_check_branch
          %288 = sbr.rel (%p286) target = $region60
        $region59: #{tpu_custom_call.1} parent=43 // pred_region
          %289 = dma.done [#allocation9], 2048
        $region60: #{tpu_custom_call.1} parent=43 // pred_fallthru
          _
        %s290 = sand.u32 %s33, 1
        %s291 = scalar_lea.sflag [#allocation3], %s290
        %s292 = sand.u32 %s33, 1
        %s293 = smul.addr %s292, 16
        %s294 = scalar_lea.vmem [#allocation2], %s293
        %p295 = pneg %p46
        %p296 = pneg %p43
        %p297 = pneg %p67
        %p298 = pneg %p64
        %p299 = pneg %p88
        %p300 = pneg %p85
        %p301 = pneg %p109
        %p302 = pneg %p106
        %p303 = pneg %p130
        %p304 = pneg %p127
        %p305 = pneg %p151
        %p306 = pneg %p148
        %p307 = pneg %p177
        %p308 = pneg %p174
        %s309 = sand.u32 %s164, 1
        %s310 = scalar_lea.sflag [#allocation4], %s309
        %s311 = sand.u32 %s164, 1
        %s312 = scalar_lea.vmem [#allocation10], %s311
        %v313 = vld [vmem:[%s273] sm:$0xff]
        %v314 = vld [vmem:[%s273 + $0x8] sm:$0xff]
        %v315 = vld [vmem:[#allocation7] sm:$0xff]
        %v316 = vld [vmem:[#allocation7 + $0x8] sm:$0xff]
        %v317 = vld [vmem:[#allocation7 + $0x10] sm:$0xff]
        %v318 = vld [vmem:[#allocation7 + $0x18] sm:$0xff]
        %v319 = vrot.slane %v313, 1
        %v320 = vrot.slane %v314, 1
        %v321 = vlaneseq
        %v322 = vshrl.u32 %v321, 7
        %vm323 = vcmp.lt.s32.totalorder %v322, 7
        %v324 = vsel %vm323, %v319, %v320
        %v325 = vsel %vm323, %v320, %v319
        %v326 = vld [vmem:[#allocation7 + $0x20] sm:$0xff]
        %v327 = vld [vmem:[#allocation7 + $0x28] sm:$0xff]
        %v328 = vld [vmem:[#allocation7 + $0x30] sm:$0xff]
        %v329 = vld [vmem:[#allocation7 + $0x38] sm:$0xff]
        %vm330 = vcmask 261120
        %v332 = vsel %vm330, %v324, 0
        %v335 = vsel %vm330, %v325, 0
        %337 = vmatprep.subr.mxu0 0.0
        %338 = vmatpush1.msra.mxu0 %v326
        %339 = vmatprep.subr.mxu0 0.0
        %340 = vmatpush1.msra.mxu0 %v327
        %341 = vmatprep.subr.mxu0 0.0
        %342 = vmatpush1.msra.mxu0 %v328
        %343 = vmatprep.subr.mxu0 0.0
        %344 = vmatpush1.msra.mxu0 %v329
        %345 = vmatprep.subr.mxu0 0.0
        %346 = vmatpush1.msra.mxu0 0.0
        %347 = vmatprep.subr.mxu0 0.0
        %348 = vmatpush1.msra.mxu0 0.0
        %349 = vmatprep.subr.mxu0 0.0
        %350 = vmatpush1.msra.mxu0 0.0
        %351 = vmatprep.subr.mxu0 0.0
        %352 = vmatpush1.msra.mxu0 0.0
        %353 = vmatprep.subr.mxu0 0.0
        %354 = vmatpush1.msra.mxu0 0.0
        %355 = vmatprep.subr.mxu0 0.0
        %356 = vmatpush1.msra.mxu0 0.0
        %357 = vmatprep.subr.mxu0 0.0
        %358 = vmatpush1.msra.mxu0 0.0
        %359 = vmatprep.subr.mxu0 0.0
        %360 = vmatpush1.msra.mxu0 0.0
        %361 = vmatprep.subr.mxu0 0.0
        %362 = vmatpush1.msra.mxu0 0.0
        %363 = vmatprep.subr.mxu0 0.0
        %364 = vmatpush1.msra.mxu0 0.0
        %365 = vmatprep.subr.mxu0 0.0
        %366 = vmatpush1.msra.mxu0 0.0
        %367 = vmatprep.subr.mxu0 0.0
        %368 = vmatpush1.msra.mxu0 0.0
        %369 = vmatprep.subr.mxu0 0.0
        %370 = vmatpush1.msra.mxu0 0.0
        %371 = vmatprep.subr.mxu0 0.0
        %372 = vmatpush1.msra.mxu0 0.0
        %373 = vmatprep.subr.mxu0 0.0
        %374 = vmatpush1.msra.mxu0 0.0
        %375 = vmatprep.subr.mxu0 0.0
        %376 = vmatpush1.msra.mxu0 0.0
        %377 = vmatprep.subr.mxu0 0.0
        %378 = vmatpush1.msra.mxu0 0.0
        %379 = vmatprep.subr.mxu0 0.0
        %380 = vmatpush1.msra.mxu0 0.0
        %381 = vmatprep.subr.mxu0 0.0
        %382 = vmatpush1.msra.mxu0 0.0
        %383 = vmatprep.subr.mxu0 0.0
        %384 = vmatpush1.msra.mxu0 0.0
        %385 = vmatprep.subr.mxu0 0.0
        %386 = vmatpush1.msra.mxu0 0.0
        %387 = vmatprep.subr.mxu0 0.0
        %388 = vmatpush1.msra.mxu0 0.0
        %389 = vmatprep.subr.mxu0 0.0
        %390 = vmatpush1.msra.mxu0 0.0
        %391 = vmatprep.subr.mxu0 0.0
        %392 = vmatpush1.msra.mxu0 0.0
        %393 = vmatprep.subr.mxu0 0.0
        %394 = vmatpush1.msra.mxu0 0.0
        %395 = vmatprep.subr.mxu0 0.0
        %396 = vmatpush1.msra.mxu0 0.0
        %397 = vmatprep.subr.mxu0 0.0
        %398 = vmatpush1.msra.mxu0 0.0
        %399 = vmatprep.subr.mxu0 0.0
        %400 = vmatpush1.msra.mxu0 0.0
        %401 = vmatprep.mubr.f32.mxu0 0.0
        %402 = vmatmul.mubr.f32.gmra.mrb[0].mxu0 %v332
        %v403 = vpop.f32.mrb[0].mxu0
        %v404 = vadd.f32 0.0, %v403
        %v405 = vpop.f32.mrb[0].mxu0
        %406 = vmatprep.mubr.f32.mxu0 0.0
        %407 = vmatmul.mubr.f32.gmra.mrb[0].mxu0 %v335
        %v408 = vpop.f32.mrb[0].mxu0
        %v409 = vadd.f32 0.0, %v408
        %v410 = vpop.f32.mrb[0].mxu0
        %411 = vdwg.mxu0
        %v413 = vsel %vm330, %v313, 0
        %v416 = vsel %vm330, %v314, 0
        %418 = vmatprep.subr.mxu0 0.0
        %419 = vmatpush1.msra.mxu0 %v315
        %420 = vmatprep.subr.mxu0 0.0
        %421 = vmatpush1.msra.mxu0 %v316
        %422 = vmatprep.subr.mxu0 0.0
        %423 = vmatpush1.msra.mxu0 %v317
        %424 = vmatprep.subr.mxu0 0.0
        %425 = vmatpush1.msra.mxu0 %v318
        %426 = vmatprep.subr.mxu0 0.0
        %427 = vmatpush1.msra.mxu0 0.0
        %428 = vmatprep.subr.mxu0 0.0
        %429 = vmatpush1.msra.mxu0 0.0
        %430 = vmatprep.subr.mxu0 0.0
        %431 = vmatpush1.msra.mxu0 0.0
        %432 = vmatprep.subr.mxu0 0.0
        %433 = vmatpush1.msra.mxu0 0.0
        %434 = vmatprep.subr.mxu0 0.0
        %435 = vmatpush1.msra.mxu0 0.0
        %436 = vmatprep.subr.mxu0 0.0
        %437 = vmatpush1.msra.mxu0 0.0
        %438 = vmatprep.subr.mxu0 0.0
        %439 = vmatpush1.msra.mxu0 0.0
        %440 = vmatprep.subr.mxu0 0.0
        %441 = vmatpush1.msra.mxu0 0.0
        %442 = vmatprep.subr.mxu0 0.0
        %443 = vmatpush1.msra.mxu0 0.0
        %444 = vmatprep.subr.mxu0 0.0
        %445 = vmatpush1.msra.mxu0 0.0
        %446 = vmatprep.subr.mxu0 0.0
        %447 = vmatpush1.msra.mxu0 0.0
        %448 = vmatprep.subr.mxu0 0.0
        %449 = vmatpush1.msra.mxu0 0.0
        %450 = vmatprep.subr.mxu0 0.0
        %451 = vmatpush1.msra.mxu0 0.0
        %452 = vmatprep.subr.mxu0 0.0
        %453 = vmatpush1.msra.mxu0 0.0
        %454 = vmatprep.subr.mxu0 0.0
        %455 = vmatpush1.msra.mxu0 0.0
        %456 = vmatprep.subr.mxu0 0.0
        %457 = vmatpush1.msra.mxu0 0.0
        %458 = vmatprep.subr.mxu0 0.0
        %459 = vmatpush1.msra.mxu0 0.0
        %460 = vmatprep.subr.mxu0 0.0
        %461 = vmatpush1.msra.mxu0 0.0
        %462 = vmatprep.subr.mxu0 0.0
        %463 = vmatpush1.msra.mxu0 0.0
        %464 = vmatprep.subr.mxu0 0.0
        %465 = vmatpush1.msra.mxu0 0.0
        %466 = vmatprep.subr.mxu0 0.0
        %467 = vmatpush1.msra.mxu0 0.0
        %468 = vmatprep.subr.mxu0 0.0
        %469 = vmatpush1.msra.mxu0 0.0
        %470 = vmatprep.subr.mxu0 0.0
        %471 = vmatpush1.msra.mxu0 0.0
        %472 = vmatprep.subr.mxu0 0.0
        %473 = vmatpush1.msra.mxu0 0.0
        %474 = vmatprep.subr.mxu0 0.0
        %475 = vmatpush1.msra.mxu0 0.0
        %476 = vmatprep.subr.mxu0 0.0
        %477 = vmatpush1.msra.mxu0 0.0
        %478 = vmatprep.subr.mxu0 0.0
        %479 = vmatpush1.msra.mxu0 0.0
        %480 = vmatprep.subr.mxu0 0.0
        %481 = vmatpush1.msra.mxu0 0.0
        %482 = vmatprep.mubr.f32.mxu0 0.0
        %483 = vmatmul.mubr.f32.gmra.mrb[0].mxu0 %v413
        %v484 = vpop.f32.mrb[0].mxu0
        %v485 = vadd.f32 %v404, %v484
        %v486 = vpop.f32.mrb[0].mxu0
        %487 = vmatprep.mubr.f32.mxu0 0.0
        %488 = vmatmul.mubr.f32.gmra.mrb[0].mxu0 %v416
        %v489 = vpop.f32.mrb[0].mxu0
        %v490 = vadd.f32 %v409, %v489
        %v491 = vpop.f32.mrb[0].mxu0
        %492 = vdwg.mxu0
        %v493 = vrot.slane %v313, 2
        %v494 = vrot.slane %v314, 2
        %vm495 = vcmp.lt.s32.totalorder %v322, 6
        %v496 = vsel %vm495, %v493, %v494
        %v497 = vsel %vm495, %v494, %v493
        %v498 = vld [vmem:[#allocation7 + $0x40] sm:$0xff]
        %v499 = vld [vmem:[#allocation7 + $0x48] sm:$0xff]
        %v500 = vld [vmem:[#allocation7 + $0x50] sm:$0xff]
        %v501 = vld [vmem:[#allocation7 + $0x58] sm:$0xff]
        %v503 = vsel %vm330, %v496, 0
        %v506 = vsel %vm330, %v497, 0
        %508 = vmatprep.subr.mxu0 0.0
        %509 = vmatpush1.msra.mxu0 %v498
        %510 = vmatprep.subr.mxu0 0.0
        %511 = vmatpush1.msra.mxu0 %v499
        %512 = vmatprep.subr.mxu0 0.0
        %513 = vmatpush1.msra.mxu0 %v500
        %514 = vmatprep.subr.mxu0 0.0
        %515 = vmatpush1.msra.mxu0 %v501
        %516 = vmatprep.subr.mxu0 0.0
        %517 = vmatpush1.msra.mxu0 0.0
        %518 = vmatprep.subr.mxu0 0.0
        %519 = vmatpush1.msra.mxu0 0.0
        %520 = vmatprep.subr.mxu0 0.0
        %521 = vmatpush1.msra.mxu0 0.0
        %522 = vmatprep.subr.mxu0 0.0
        %523 = vmatpush1.msra.mxu0 0.0
        %524 = vmatprep.subr.mxu0 0.0
        %525 = vmatpush1.msra.mxu0 0.0
        %526 = vmatprep.subr.mxu0 0.0
        %527 = vmatpush1.msra.mxu0 0.0
        %528 = vmatprep.subr.mxu0 0.0
        %529 = vmatpush1.msra.mxu0 0.0
        %530 = vmatprep.subr.mxu0 0.0
        %531 = vmatpush1.msra.mxu0 0.0
        %532 = vmatprep.subr.mxu0 0.0
        %533 = vmatpush1.msra.mxu0 0.0
        %534 = vmatprep.subr.mxu0 0.0
        %535 = vmatpush1.msra.mxu0 0.0
        %536 = vmatprep.subr.mxu0 0.0
        %537 = vmatpush1.msra.mxu0 0.0
        %538 = vmatprep.subr.mxu0 0.0
        %539 = vmatpush1.msra.mxu0 0.0
        %540 = vmatprep.subr.mxu0 0.0
        %541 = vmatpush1.msra.mxu0 0.0
        %542 = vmatprep.subr.mxu0 0.0
        %543 = vmatpush1.msra.mxu0 0.0
        %544 = vmatprep.subr.mxu0 0.0
        %545 = vmatpush1.msra.mxu0 0.0
        %546 = vmatprep.subr.mxu0 0.0
        %547 = vmatpush1.msra.mxu0 0.0
        %548 = vmatprep.subr.mxu0 0.0
        %549 = vmatpush1.msra.mxu0 0.0
        %550 = vmatprep.subr.mxu0 0.0
        %551 = vmatpush1.msra.mxu0 0.0
        %552 = vmatprep.subr.mxu0 0.0
        %553 = vmatpush1.msra.mxu0 0.0
        %554 = vmatprep.subr.mxu0 0.0
        %555 = vmatpush1.msra.mxu0 0.0
        %556 = vmatprep.subr.mxu0 0.0
        %557 = vmatpush1.msra.mxu0 0.0
        %558 = vmatprep.subr.mxu0 0.0
        %559 = vmatpush1.msra.mxu0 0.0
        %560 = vmatprep.subr.mxu0 0.0
        %561 = vmatpush1.msra.mxu0 0.0
        %562 = vmatprep.subr.mxu0 0.0
        %563 = vmatpush1.msra.mxu0 0.0
        %564 = vmatprep.subr.mxu0 0.0
        %565 = vmatpush1.msra.mxu0 0.0
        %566 = vmatprep.subr.mxu0 0.0
        %567 = vmatpush1.msra.mxu0 0.0
        %568 = vmatprep.subr.mxu0 0.0
        %569 = vmatpush1.msra.mxu0 0.0
        %570 = vmatprep.subr.mxu0 0.0
        %571 = vmatpush1.msra.mxu0 0.0
        %572 = vmatprep.mubr.f32.mxu0 0.0
        %573 = vmatmul.mubr.f32.gmra.mrb[0].mxu0 %v503
        %v574 = vpop.f32.mrb[0].mxu0
        %v575 = vadd.f32 0.0, %v574
        %v576 = vpop.f32.mrb[0].mxu0
        %577 = vmatprep.mubr.f32.mxu0 0.0
        %578 = vmatmul.mubr.f32.gmra.mrb[0].mxu0 %v506
        %v579 = vpop.f32.mrb[0].mxu0
        %v580 = vadd.f32 0.0, %v579
        %v581 = vpop.f32.mrb[0].mxu0
        %582 = vdwg.mxu0
        %v583 = vadd.f32 %v485, %v575
        %v584 = vadd.f32 %v490, %v580
        %v585 = vrot.slane %v313, 3
        %v586 = vrot.slane %v314, 3
        %vm587 = vcmp.lt.s32.totalorder %v322, 5
        %v588 = vsel %vm587, %v585, %v586
        %v589 = vsel %vm587, %v586, %v585
        %v590 = vld [vmem:[#allocation7 + $0x60] sm:$0xff]
        %v591 = vld [vmem:[#allocation7 + $0x68] sm:$0xff]
        %v592 = vld [vmem:[#allocation7 + $0x70] sm:$0xff]
        %v593 = vld [vmem:[#allocation7 + $0x78] sm:$0xff]
        %v595 = vsel %vm330, %v588, 0
        %v598 = vsel %vm330, %v589, 0
        %600 = vmatprep.subr.mxu0 0.0
        %601 = vmatpush1.msra.mxu0 %v590
        %602 = vmatprep.subr.mxu0 0.0
        %603 = vmatpush1.msra.mxu0 %v591
        %604 = vmatprep.subr.mxu0 0.0
        %605 = vmatpush1.msra.mxu0 %v592
        %606 = vmatprep.subr.mxu0 0.0
        %607 = vmatpush1.msra.mxu0 %v593
        %608 = vmatprep.subr.mxu0 0.0
        %609 = vmatpush1.msra.mxu0 0.0
        %610 = vmatprep.subr.mxu0 0.0
        %611 = vmatpush1.msra.mxu0 0.0
        %612 = vmatprep.subr.mxu0 0.0
        %613 = vmatpush1.msra.mxu0 0.0
        %614 = vmatprep.subr.mxu0 0.0
        %615 = vmatpush1.msra.mxu0 0.0
        %616 = vmatprep.subr.mxu0 0.0
        %617 = vmatpush1.msra.mxu0 0.0
        %618 = vmatprep.subr.mxu0 0.0
        %619 = vmatpush1.msra.mxu0 0.0
        %620 = vmatprep.subr.mxu0 0.0
        %621 = vmatpush1.msra.mxu0 0.0
        %622 = vmatprep.subr.mxu0 0.0
        %623 = vmatpush1.msra.mxu0 0.0
        %624 = vmatprep.subr.mxu0 0.0
        %625 = vmatpush1.msra.mxu0 0.0
        %626 = vmatprep.subr.mxu0 0.0
        %627 = vmatpush1.msra.mxu0 0.0
        %628 = vmatprep.subr.mxu0 0.0
        %629 = vmatpush1.msra.mxu0 0.0
        %630 = vmatprep.subr.mxu0 0.0
        %631 = vmatpush1.msra.mxu0 0.0
        %632 = vmatprep.subr.mxu0 0.0
        %633 = vmatpush1.msra.mxu0 0.0
        %634 = vmatprep.subr.mxu0 0.0
        %635 = vmatpush1.msra.mxu0 0.0
        %636 = vmatprep.subr.mxu0 0.0
        %637 = vmatpush1.msra.mxu0 0.0
        %638 = vmatprep.subr.mxu0 0.0
        %639 = vmatpush1.msra.mxu0 0.0
        %640 = vmatprep.subr.mxu0 0.0
        %641 = vmatpush1.msra.mxu0 0.0
        %642 = vmatprep.subr.mxu0 0.0
        %643 = vmatpush1.msra.mxu0 0.0
        %644 = vmatprep.subr.mxu0 0.0
        %645 = vmatpush1.msra.mxu0 0.0
        %646 = vmatprep.subr.mxu0 0.0
        %647 = vmatpush1.msra.mxu0 0.0
        %648 = vmatprep.subr.mxu0 0.0
        %649 = vmatpush1.msra.mxu0 0.0
        %650 = vmatprep.subr.mxu0 0.0
        %651 = vmatpush1.msra.mxu0 0.0
        %652 = vmatprep.subr.mxu0 0.0
        %653 = vmatpush1.msra.mxu0 0.0
        %654 = vmatprep.subr.mxu0 0.0
        %655 = vmatpush1.msra.mxu0 0.0
        %656 = vmatprep.subr.mxu0 0.0
        %657 = vmatpush1.msra.mxu0 0.0
        %658 = vmatprep.subr.mxu0 0.0
        %659 = vmatpush1.msra.mxu0 0.0
        %660 = vmatprep.subr.mxu0 0.0
        %661 = vmatpush1.msra.mxu0 0.0
        %662 = vmatprep.subr.mxu0 0.0
        %663 = vmatpush1.msra.mxu0 0.0
        %664 = vmatprep.mubr.f32.mxu0 0.0
        %665 = vmatmul.mubr.f32.gmra.mrb[0].mxu0 %v595
        %v666 = vpop.f32.mrb[0].mxu0
        %v667 = vadd.f32 0.0, %v666
        %v668 = vpop.f32.mrb[0].mxu0
        %669 = vmatprep.mubr.f32.mxu0 0.0
        %670 = vmatmul.mubr.f32.gmra.mrb[0].mxu0 %v598
        %v671 = vpop.f32.mrb[0].mxu0
        %v672 = vadd.f32 0.0, %v671
        %v673 = vpop.f32.mrb[0].mxu0
        %674 = vdwg.mxu0
        %v675 = vadd.f32 %v583, %v667
        %v676 = vadd.f32 %v584, %v672
        %v677 = vrot.slane %v313, 4
        %v678 = vrot.slane %v314, 4
        %vm679 = vcmp.lt.s32.totalorder %v322, 4
        %v680 = vsel %vm679, %v677, %v678
        %v681 = vsel %vm679, %v678, %v677
        %v682 = vld [vmem:[#allocation7 + $0x80] sm:$0xff]
        %v683 = vld [vmem:[#allocation7 + $0x88] sm:$0xff]
        %v684 = vld [vmem:[#allocation7 + $0x90] sm:$0xff]
        %v685 = vld [vmem:[#allocation7 + $0x98] sm:$0xff]
        %v687 = vsel %vm330, %v680, 0
        %v690 = vsel %vm330, %v681, 0
        %692 = vmatprep.subr.mxu0 0.0
        %693 = vmatpush1.msra.mxu0 %v682
        %694 = vmatprep.subr.mxu0 0.0
        %695 = vmatpush1.msra.mxu0 %v683
        %696 = vmatprep.subr.mxu0 0.0
        %697 = vmatpush1.msra.mxu0 %v684
        %698 = vmatprep.subr.mxu0 0.0
        %699 = vmatpush1.msra.mxu0 %v685
        %700 = vmatprep.subr.mxu0 0.0
        %701 = vmatpush1.msra.mxu0 0.0
        %702 = vmatprep.subr.mxu0 0.0
        %703 = vmatpush1.msra.mxu0 0.0
        %704 = vmatprep.subr.mxu0 0.0
        %705 = vmatpush1.msra.mxu0 0.0
        %706 = vmatprep.subr.mxu0 0.0
        %707 = vmatpush1.msra.mxu0 0.0
        %708 = vmatprep.subr.mxu0 0.0
        %709 = vmatpush1.msra.mxu0 0.0
        %710 = vmatprep.subr.mxu0 0.0
        %711 = vmatpush1.msra.mxu0 0.0
        %712 = vmatprep.subr.mxu0 0.0
        %713 = vmatpush1.msra.mxu0 0.0
        %714 = vmatprep.subr.mxu0 0.0
        %715 = vmatpush1.msra.mxu0 0.0
        %716 = vmatprep.subr.mxu0 0.0
        %717 = vmatpush1.msra.mxu0 0.0
        %718 = vmatprep.subr.mxu0 0.0
        %719 = vmatpush1.msra.mxu0 0.0
        %720 = vmatprep.subr.mxu0 0.0
        %721 = vmatpush1.msra.mxu0 0.0
        %722 = vmatprep.subr.mxu0 0.0
        %723 = vmatpush1.msra.mxu0 0.0
        %724 = vmatprep.subr.mxu0 0.0
        %725 = vmatpush1.msra.mxu0 0.0
        %726 = vmatprep.subr.mxu0 0.0
        %727 = vmatpush1.msra.mxu0 0.0
        %728 = vmatprep.subr.mxu0 0.0
        %729 = vmatpush1.msra.mxu0 0.0
        %730 = vmatprep.subr.mxu0 0.0
        %731 = vmatpush1.msra.mxu0 0.0
        %732 = vmatprep.subr.mxu0 0.0
        %733 = vmatpush1.msra.mxu0 0.0
        %734 = vmatprep.subr.mxu0 0.0
        %735 = vmatpush1.msra.mxu0 0.0
        %736 = vmatprep.subr.mxu0 0.0
        %737 = vmatpush1.msra.mxu0 0.0
        %738 = vmatprep.subr.mxu0 0.0
        %739 = vmatpush1.msra.mxu0 0.0
        %740 = vmatprep.subr.mxu0 0.0
        %741 = vmatpush1.msra.mxu0 0.0
        %742 = vmatprep.subr.mxu0 0.0
        %743 = vmatpush1.msra.mxu0 0.0
        %744 = vmatprep.subr.mxu0 0.0
        %745 = vmatpush1.msra.mxu0 0.0
        %746 = vmatprep.subr.mxu0 0.0
        %747 = vmatpush1.msra.mxu0 0.0
        %748 = vmatprep.subr.mxu0 0.0
        %749 = vmatpush1.msra.mxu0 0.0
        %750 = vmatprep.subr.mxu0 0.0
        %751 = vmatpush1.msra.mxu0 0.0
        %752 = vmatprep.subr.mxu0 0.0
        %753 = vmatpush1.msra.mxu0 0.0
        %754 = vmatprep.subr.mxu0 0.0
        %755 = vmatpush1.msra.mxu0 0.0
        %756 = vmatprep.mubr.f32.mxu0 0.0
        %757 = vmatmul.mubr.f32.gmra.mrb[0].mxu0 %v687
        %v758 = vpop.f32.mrb[0].mxu0
        %v759 = vadd.f32 0.0, %v758
        %v760 = vpop.f32.mrb[0].mxu0
        %761 = vmatprep.mubr.f32.mxu0 0.0
        %762 = vmatmul.mubr.f32.gmra.mrb[0].mxu0 %v690
        %v763 = vpop.f32.mrb[0].mxu0
        %v764 = vadd.f32 0.0, %v763
        %v765 = vpop.f32.mrb[0].mxu0
        %766 = vdwg.mxu0
        %v767 = vadd.f32 %v675, %v759
        %v768 = vadd.f32 %v676, %v764
        %v769 = vld [vmem:[#allocation5] sm:$0xff]
        %v770 = vld [vmem:[#allocation5 + $0x8] sm:$0xff]
        %v771 = vadd.f32 %v767, %v769
        %v772 = vadd.f32 %v768, %v770
        %v773 = vmax.f32 %v771, %v772
        %v774 = vrot.slane %v773, 4
        %v775 = vmax.f32 %v773, %v774
        %v776 = vrot.slane %v775, 2
        %v777 = vmax.f32 %v775, %v776
        %v778 = vrot.slane %v777, 1
        %v779 = vmax.f32 %v777, %v778
        %v780 = vld [vmem:[%s3] sm:$0x1]
        %v781 = vadd.f32 %v779, %v780
        %v782 = vld [vmem:[#allocation8] sm:$0xff]
        %v783 = vld [vmem:[#allocation8 + $0x8] sm:$0xff]
        %v784 = vld [vmem:[#allocation8 + $0x10] sm:$0xff]
        %v785 = vld [vmem:[#allocation8 + $0x18] sm:$0xff]
        %v786 = vld [vmem:[#allocation8 + $0x20] sm:$0xff]
        %v787 = vld [vmem:[#allocation8 + $0x28] sm:$0xff]
        %v788 = vld [vmem:[#allocation8 + $0x30] sm:$0xff]
        %v789 = vld [vmem:[#allocation8 + $0x38] sm:$0xff]
        %v790 = vld [vmem:[#allocation8 + $0x40] sm:$0xff]
        %v791 = vld [vmem:[#allocation8 + $0x48] sm:$0xff]
        %v792 = vld [vmem:[#allocation8 + $0x50] sm:$0xff]
        %v793 = vld [vmem:[#allocation8 + $0x58] sm:$0xff]
        %v794 = vld [vmem:[#allocation8 + $0x60] sm:$0xff]
        %v795 = vld [vmem:[#allocation8 + $0x68] sm:$0xff]
        %v796 = vld [vmem:[#allocation8 + $0x70] sm:$0xff]
        %v797 = vld [vmem:[#allocation8 + $0x78] sm:$0xff]
        %v798 = vld [vmem:[%s5] sm:$0x1]
        %799 = vmatprep.subr.mxu0 0.0
        %800 = vmatpush1.msra.mxu0 %v782
        %801 = vmatprep.subr.mxu0 0.0
        %802 = vmatpush1.msra.mxu0 %v783
        %803 = vmatprep.subr.mxu0 0.0
        %804 = vmatpush1.msra.mxu0 %v784
        %805 = vmatprep.subr.mxu0 0.0
        %806 = vmatpush1.msra.mxu0 %v785
        %807 = vmatprep.subr.mxu0 0.0
        %808 = vmatpush1.msra.mxu0 %v786
        %809 = vmatprep.subr.mxu0 0.0
        %810 = vmatpush1.msra.mxu0 %v787
        %811 = vmatprep.subr.mxu0 0.0
        %812 = vmatpush1.msra.mxu0 %v788
        %813 = vmatprep.subr.mxu0 0.0
        %814 = vmatpush1.msra.mxu0 %v789
        %815 = vmatprep.subr.mxu0 0.0
        %816 = vmatpush1.msra.mxu0 %v790
        %817 = vmatprep.subr.mxu0 0.0
        %818 = vmatpush1.msra.mxu0 %v791
        %819 = vmatprep.subr.mxu0 0.0
        %820 = vmatpush1.msra.mxu0 %v792
        %821 = vmatprep.subr.mxu0 0.0
        %822 = vmatpush1.msra.mxu0 %v793
        %823 = vmatprep.subr.mxu0 0.0
        %824 = vmatpush1.msra.mxu0 %v794
        %825 = vmatprep.subr.mxu0 0.0
        %826 = vmatpush1.msra.mxu0 %v795
        %827 = vmatprep.subr.mxu0 0.0
        %828 = vmatpush1.msra.mxu0 %v796
        %829 = vmatprep.subr.mxu0 0.0
        %830 = vmatpush1.msra.mxu0 %v797
        %831 = vmatprep.subr.mxu0 0.0
        %832 = vmatpush1.msra.mxu0 0.0
        %833 = vmatprep.subr.mxu0 0.0
        %834 = vmatpush1.msra.mxu0 0.0
        %835 = vmatprep.subr.mxu0 0.0
        %836 = vmatpush1.msra.mxu0 0.0
        %837 = vmatprep.subr.mxu0 0.0
        %838 = vmatpush1.msra.mxu0 0.0
        %839 = vmatprep.subr.mxu0 0.0
        %840 = vmatpush1.msra.mxu0 0.0
        %841 = vmatprep.subr.mxu0 0.0
        %842 = vmatpush1.msra.mxu0 0.0
        %843 = vmatprep.subr.mxu0 0.0
        %844 = vmatpush1.msra.mxu0 0.0
        %845 = vmatprep.subr.mxu0 0.0
        %846 = vmatpush1.msra.mxu0 0.0
        %847 = vmatprep.subr.mxu0 0.0
        %848 = vmatpush1.msra.mxu0 0.0
        %849 = vmatprep.subr.mxu0 0.0
        %850 = vmatpush1.msra.mxu0 0.0
        %851 = vmatprep.subr.mxu0 0.0
        %852 = vmatpush1.msra.mxu0 0.0
        %853 = vmatprep.subr.mxu0 0.0
        %854 = vmatpush1.msra.mxu0 0.0
        %855 = vmatprep.subr.mxu0 0.0
        %856 = vmatpush1.msra.mxu0 0.0
        %857 = vmatprep.subr.mxu0 0.0
        %858 = vmatpush1.msra.mxu0 0.0
        %859 = vmatprep.subr.mxu0 0.0
        %860 = vmatpush1.msra.mxu0 0.0
        %861 = vmatprep.subr.mxu0 0.0
        %862 = vmatpush1.msra.mxu0 0.0
        %863 = vmatprep.mubr.f32.mxu0 0.0
        %864 = vmatmul.mubr.f32.gmra.mrb[0].mxu0 %v781
        %v865 = vpop.f32.mrb[0].mxu0
        %v866 = vadd.f32 %v798, %v865
        %v867 = vpop.f32.mrb[0].mxu0
        %868 = vdwg.mxu0
        %869 = vst [vmem:[%s312] sm:$0x1] %v866
        %s870 = sand.u32 %s164, 1
        %s871 = scalar_lea.sflag [#allocation4], %s870
        %s872 = sand.u32 %s164, 1
        %s873 = scalar_lea.vmem [#allocation10], %s872
        // Predicated region
        $region61: #{tpu_custom_call.1} parent=43 // pred_check
          %p874 = pneg %p174
        $region62: #{tpu_custom_call.1} parent=43 // pred_check_branch
          %876 = sbr.rel (%p874) target = $region64
        $region63: #{tpu_custom_call.1} parent=43 // pred_region
          %s878 = ssub.s32 16, 16
          %879 = vsyncadd %s871, %s878
          %s880 = smul.addr %s25, 16
          %s881 = scalar_lea.hbm %s6, %s880
          %s883 = sshll.u32 %s873, 4
          %s884 = int_to_ptr.vmem [resolvable:$true] %s883
          %886 = dma.vmem_to_hbm [thread:$0]  %s884, 16, %s881, %s871
        $region64: #{tpu_custom_call.1} parent=43 // pred_fallthru
          _
      $region44: #{tpu_custom_call.1} parent=5 // pred_fallthru
        _
      %p887 = scmp.le.s32.totalorder 2, %s20
      // Predicated region
      $region65: #{tpu_custom_call.1} parent=5 // pred_check
        %p888 = pneg %p887
      $region66: #{tpu_custom_call.1} parent=5 // pred_check_branch
        %890 = sbr.rel (%p888) target = $region68
      $region67: #{tpu_custom_call.1} parent=5 // pred_region
        %s891 = ssub.s32 %s20, 2
        // Predicated region
        $region69: #{tpu_custom_call.1} parent=67 // pred_check
          %p892 = pneg %p180
        $region70: #{tpu_custom_call.1} parent=67 // pred_check_branch
          %894 = sbr.rel (%p892) target = $region72
        $region71: #{tpu_custom_call.1} parent=67 // pred_region
          %s895 = sand.u32 %s165, 1
          %s896 = scalar_lea.sflag [#allocation4], %s895
          %s897 = sand.u32 %s165, 1
          %s898 = scalar_lea.vmem [#allocation10], %s897
          %899 = dma.done %s896, 16
        $region72: #{tpu_custom_call.1} parent=67 // pred_fallthru
          _
      $region68: #{tpu_custom_call.1} parent=5 // pred_fallthru
        _
    $region6: #{tpu_custom_call.1} parent=1 // loop_footer
      %s24 = sadd.s32 1, %s20
    $region7: #{tpu_custom_call.1} parent=1 // loop_footer_branch
      %19 = sbr.rel target = $region3
    $region8: #{tpu_custom_call.1} parent=1 // loop_exit
      _
    %900 = vsyncpa [#allocation3], 1
    %s901 = scalar_lea.sflag [#allocation3], 1
    %902 = vsyncpa %s901, 1
    %903 = vsyncpa [#allocation6], 1
    %904 = vsyncpa [#allocation9], 1
    %905 = vsyncpa [#allocation4], 1
    %s906 = scalar_lea.sflag [#allocation4], 1
    %907 = vsyncpa %s906, 1

</llo_original>
